<compile_context>
chip_gen: v6e
topology: v6e:2x2x1
jax: 0.10.0
libtpu: 0.0.40
codegen_flags: <defaults>
</compile_context>

<pallas_src>
import functools

import jax
import jax.numpy as jnp
from jax.experimental import pallas as pl
from jax.experimental.pallas import tpu as pltpu


# ----------------------------- Pallas kernel --------------------------------

def _patch_merging_kernel(x_ref, w_top_ref, w_bot_ref, bias_ref, o_ref, *, wh, eps):
    # x_ref     : (TP, 2*wh, 2C)  natural-layout row-pair tile
    #             [:, :wh, :] = even-H token chunks  [x0 | x2]
    #             [:, wh:, :] = odd-H  token chunks  [x1 | x3]
    # w_top_ref : (2C, Nout)  gamma-folded reduction rows for the even chunk
    # w_bot_ref : (2C, Nout)  gamma-folded reduction rows for the odd chunk
    # bias_ref  : (1, Nout)   beta @ W  (f32)
    # o_ref     : (TP, wh, Nout)
    tp = x_ref.shape[0]
    c2 = x_ref.shape[2]          # 2C
    n = o_ref.shape[2]           # Nout = 2C

    # Lane slices + (free when wh % 8 == 0) shape-cast to token-major 2D tiles.
    xe = x_ref[:, :wh, :].reshape(tp * wh, c2).astype(jnp.float32)
    xo = x_ref[:, wh:, :].reshape(tp * wh, c2).astype(jnp.float32)

    # LayerNorm over the full 4C (= both 2C chunks), f32 stats.
    inv_4c = 1.0 / (2 * c2)
    mean = (jnp.sum(xe, axis=-1, keepdims=True)
            + jnp.sum(xo, axis=-1, keepdims=True)) * inv_4c
    xce = xe - mean
    xco = xo - mean
    var = (jnp.sum(xce * xce, axis=-1, keepdims=True)
           + jnp.sum(xco * xco, axis=-1, keepdims=True)) * inv_4c
    inv = jax.lax.rsqrt(var + eps)                      # EUP slot

    ye = (xce * inv).astype(w_top_ref.dtype)
    yo = (xco * inv).astype(w_bot_ref.dtype)

    # Reduction as two K=2C matmuls, f32 accumulation on the MXU.
    out = jnp.dot(ye, w_top_ref[...], preferred_element_type=jnp.float32)
    out = out + jnp.dot(yo, w_bot_ref[...], preferred_element_type=jnp.float32)
    out = out + bias_ref[...]                           # folded LN beta term

    o_ref[...] = out.reshape(tp, wh, n).astype(o_ref.dtype)


# ------------------------------ JAX wrapper ----------------------------------

def patch_merging(x, H, W, gamma, beta, w_red, *, eps=1e-5, block_tokens=1024):
    """PatchMerging forward.

    x:      (B, H*W, C)        activation (f32 or bf16)
    gamma:  (4C,)              LayerNorm weight
    beta:   (4C,)              LayerNorm bias
    w_red:  (4C, 2C)           nn.Linear(4C, 2C, bias=False) weight, transposed for x @ W
    returns (B, ceil(H/2)*ceil(W/2), 2C)
    """
    B, L, C = x.shape
    assert L == H * W, "input feature has wrong size"
    n_out = w_red.shape[1]
    assert w_red.shape[0] == 4 * C

    # ---- layout plumbing: ONLY free reshapes of the big activation ----
    xr = x.reshape(B, H, W, C)
    Hp, Wp = H + (H % 2), W + (W % 2)
    if (Hp, Wp) != (H, W):                       # odd-size pad (rare; unavoidable)
        xr = jnp.pad(xr, ((0, 0), (0, Hp - H), (0, Wp - W), (0, 0)))

    wh = Wp // 2                                 # merged tokens per H-row pair
    P = B * (Hp // 2)                            # number of H-row pairs
    # Free contiguous view: row-pair p = [even-H tokens | odd-H tokens], each
    # token chunk = [even-W C | odd-W C]  ->  natural order (x0,x2) / (x1,x3).
    xn = xr.reshape(P, 2 * wh, 2 * C)

    # ---- permute / fold on the SMALL tensors (torch order -> natural order) ----
    def to_nat(t):                               # (x0,x1,x2,x3) -> (x0,x2,x1,x3)
        return jnp.concatenate([t[:C], t[2 * C:3 * C], t[C:2 * C], t[3 * C:]], axis=0)

    w_nat = to_nat(w_red).astype(jnp.float32)
    g_nat = to_nat(gamma).astype(jnp.float32)
    w_scaled = w_nat * g_nat[:, None]            # fold LayerNorm gamma into the weight
    w_top = w_scaled[:2 * C].astype(w_red.dtype)
    w_bot = w_scaled[2 * C:].astype(w_red.dtype)
    bias = beta.astype(jnp.float32)[None, :] @ w_red.astype(jnp.float32)   # (1, Nout) f32

    # ---- tiling: big row-pair tiles, ragged last block (no activation pad) ----
    tp = max(1, min(P, pl.cdiv(block_tokens, wh)))     # row-pairs per grid step
    grid = (pl.cdiv(P, tp),)

    out = pl.pallas_call(
        functools.partial(_patch_merging_kernel, wh=wh, eps=eps),
        out_shape=jax.ShapeDtypeStruct((P, wh, n_out), x.dtype),
        grid=grid,
        in_specs=[
            pl.BlockSpec((tp, 2 * wh, 2 * C), lambda i: (i, 0, 0)),   # activation tile
            pl.BlockSpec((2 * C, n_out), lambda i: (0, 0)),           # W_top (resident)
            pl.BlockSpec((2 * C, n_out), lambda i: (0, 0)),           # W_bot (resident)
            pl.BlockSpec((1, n_out), lambda i: (0, 0)),               # bias  (resident)
        ],
        out_specs=pl.BlockSpec((tp, wh, n_out), lambda i: (i, 0, 0)),
        compiler_params=pltpu.CompilerParams(
            dimension_semantics=("parallel",),
            vmem_limit_bytes=64 * 1024 * 1024,
        ),
    )(xn, w_top, w_bot, bias)

    return out.reshape(B, (Hp // 2) * (Wp // 2), n_out)


# ------------------------------ pure-JAX reference ---------------------------

def reference_patch_merging(x, H, W, gamma, beta, w_red, eps=1e-5):
    B, L, C = x.shape
    xr = x.astype(jnp.float32).reshape(B, H, W, C)
    Hp, Wp = H + (H % 2), W + (W % 2)
    if (Hp, Wp) != (H, W):
        xr = jnp.pad(xr, ((0, 0), (0, Hp - H), (0, Wp - W), (0, 0)))
    x0 = xr[:, 0::2, 0::2, :]
    x1 = xr[:, 1::2, 0::2, :]
    x2 = xr[:, 0::2, 1::2, :]
    x3 = xr[:, 1::2, 1::2, :]
    xc = jnp.concatenate([x0, x1, x2, x3], axis=-1).reshape(B, -1, 4 * C)
    mean = xc.mean(-1, keepdims=True)
    var = ((xc - mean) ** 2).mean(-1, keepdims=True)
    y = (xc - mean) / jnp.sqrt(var + eps) * gamma.astype(jnp.float32) \
        + beta.astype(jnp.float32)
    return y @ w_red.astype(jnp.float32)


# ----------------------------------- main ------------------------------------

if __name__ == "__main__":
    B, H, W, dim = 2, 16, 16, 64              # x: (2, 256, 64) -> out: (2, 64, 128)

    key = jax.random.PRNGKey(0)
    kx, kg, kb, kw = jax.random.split(key, 4)
    # bf16 activation / weight path (review item): halves HBM bytes; LN stats and
    # matmul accumulation remain f32 inside the kernel.
    x = jax.random.normal(kx, (B, H * W, dim), dtype=jnp.float32).astype(jnp.bfloat16)
    gamma = 1.0 + 0.02 * jax.random.normal(kg, (4 * dim,), jnp.float32)
    beta = 0.02 * jax.random.normal(kb, (4 * dim,), jnp.float32)
    # torch nn.Linear(4*dim, 2*dim, bias=False).weight is (2*dim, 4*dim); stored transposed.
    w_red = (jax.random.normal(kw, (4 * dim, 2 * dim), jnp.float32)
             * (4 * dim) ** -0.5).astype(jnp.bfloat16)

    fn = jax.jit(patch_merging, static_argnames=("H", "W", "eps", "block_tokens"))

    out = jax.block_until_ready(
        fn(x, H=H, W=W, gamma=gamma, beta=beta, w_red=w_red,
           eps=1e-5, block_tokens=1024))
    ref = reference_patch_merging(x, H, W, gamma, beta, w_red)

    assert out.shape == (B, (H // 2) * (W // 2), 2 * dim)
    assert jnp.allclose(out.astype(jnp.float32), ref, atol=5e-2, rtol=5e-2), \
        "mismatch vs JAX reference (bf16 path)"

    # Also exercise a multi-step grid with a ragged last block (no activation pad).
    out_small = jax.block_until_ready(
        fn(x, H=H, W=W, gamma=gamma, beta=beta, w_red=w_red,
           eps=1e-5, block_tokens=48))
    assert jnp.allclose(out_small.astype(jnp.float32), ref, atol=5e-2, rtol=5e-2), \
        "mismatch vs JAX reference (ragged multi-step grid)"

    print("KERNEL_OK")
</pallas_src>

<mosaic_0001>
module attributes {stable_mosaic.version = 11 : i64} {
  func.func @_patch_merging_kernel(%arg0: i32, %arg1: memref<16x16x128xbf16, #tpu.memory_space<vmem>>, %arg2: memref<128x128xbf16, #tpu.memory_space<vmem>>, %arg3: memref<128x128xbf16, #tpu.memory_space<vmem>>, %arg4: memref<1x128xf32, #tpu.memory_space<vmem>>, %arg5: memref<16x8x128xbf16, #tpu.memory_space<vmem>>) attributes {dimension_semantics = [#tpu.dimension_semantics<parallel>], iteration_bounds = array<i64: 1>, scalar_prefetch = 0 : i64, scratch_operands = 0 : i64, tpu.core_type = #tpu.core_type<tc>, window_params = [{transform_indices = @transform_0, window_bounds = array<i64: 16, 16, 128>}, {pipeline_mode = #tpu.pipeline_mode<synchronous>, transform_indices = @transform_1, window_bounds = array<i64: 128, 128>}, {pipeline_mode = #tpu.pipeline_mode<synchronous>, transform_indices = @transform_2, window_bounds = array<i64: 128, 128>}, {pipeline_mode = #tpu.pipeline_mode<synchronous>, transform_indices = @transform_3, window_bounds = array<i64: 1, 128>}, {transform_indices = @transform_4, window_bounds = array<i64: 16, 8, 128>}]} {
    %c0 = arith.constant 0 : index
    %c0_0 = arith.constant 0 : index
    %c0_1 = arith.constant 0 : index
    %0 = vector.load %arg1[%c0, %c0_0, %c0_1] : memref<16x16x128xbf16, #tpu.memory_space<vmem>>, vector<16x8x128xbf16>
    %1 = vector.shape_cast %0 : vector<16x8x128xbf16> to vector<128x128xbf16>
    %2 = arith.extf %1 : vector<128x128xbf16> to vector<128x128xf32>
    %c0_2 = arith.constant 0 : index
    %c8 = arith.constant 8 : index
    %c0_3 = arith.constant 0 : index
    %3 = vector.load %arg1[%c0_2, %c8, %c0_3] : memref<16x16x128xbf16, #tpu.memory_space<vmem>>, vector<16x8x128xbf16>
    %4 = vector.shape_cast %3 : vector<16x8x128xbf16> to vector<128x128xbf16>
    %5 = arith.extf %4 : vector<128x128xbf16> to vector<128x128xf32>
    %cst = arith.constant dense<0.000000e+00> : vector<128xf32>
    %6 = vector.multi_reduction <add>, %2, %cst [1] : vector<128x128xf32> to vector<128xf32>
    %7 = vector.shape_cast %6 : vector<128xf32> to vector<128x1xf32>
    %cst_4 = arith.constant dense<0.000000e+00> : vector<128xf32>
    %8 = vector.multi_reduction <add>, %5, %cst_4 [1] : vector<128x128xf32> to vector<128xf32>
    %9 = vector.shape_cast %8 : vector<128xf32> to vector<128x1xf32>
    %10 = arith.addf %7, %9 : vector<128x1xf32>
    %cst_5 = arith.constant 3.906250e-03 : f32
    %11 = vector.broadcast %cst_5 : f32 to vector<128x1xf32>
    %12 = arith.mulf %10, %11 : vector<128x1xf32>
    %13 = vector.broadcast %12 : vector<128x1xf32> to vector<128x128xf32>
    %14 = arith.subf %2, %13 : vector<128x128xf32>
    %15 = vector.broadcast %12 : vector<128x1xf32> to vector<128x128xf32>
    %16 = arith.subf %5, %15 : vector<128x128xf32>
    %17 = arith.mulf %14, %14 : vector<128x128xf32>
    %cst_6 = arith.constant dense<0.000000e+00> : vector<128xf32>
    %18 = vector.multi_reduction <add>, %17, %cst_6 [1] : vector<128x128xf32> to vector<128xf32>
    %19 = vector.shape_cast %18 : vector<128xf32> to vector<128x1xf32>
    %20 = arith.mulf %16, %16 : vector<128x128xf32>
    %cst_7 = arith.constant dense<0.000000e+00> : vector<128xf32>
    %21 = vector.multi_reduction <add>, %20, %cst_7 [1] : vector<128x128xf32> to vector<128xf32>
    %22 = vector.shape_cast %21 : vector<128xf32> to vector<128x1xf32>
    %23 = arith.addf %19, %22 : vector<128x1xf32>
    %cst_8 = arith.constant 3.906250e-03 : f32
    %24 = vector.broadcast %cst_8 : f32 to vector<128x1xf32>
    %25 = arith.mulf %23, %24 : vector<128x1xf32>
    %cst_9 = arith.constant 9.99999974E-6 : f32
    %26 = vector.broadcast %cst_9 : f32 to vector<128x1xf32>
    %27 = arith.addf %25, %26 : vector<128x1xf32>
    %28 = math.rsqrt %27 : vector<128x1xf32>
    %29 = vector.broadcast %28 : vector<128x1xf32> to vector<128x128xf32>
    %30 = arith.mulf %14, %29 : vector<128x128xf32>
    %31 = arith.truncf %30 : vector<128x128xf32> to vector<128x128xbf16>
    %32 = vector.broadcast %28 : vector<128x1xf32> to vector<128x128xf32>
    %33 = arith.mulf %16, %32 : vector<128x128xf32>
    %34 = arith.truncf %33 : vector<128x128xf32> to vector<128x128xbf16>
    %c0_10 = arith.constant 0 : index
    %c0_11 = arith.constant 0 : index
    %35 = vector.load %arg2[%c0_10, %c0_11] : memref<128x128xbf16, #tpu.memory_space<vmem>>, vector<128x128xbf16>
    %cst_12 = arith.constant dense<0.000000e+00> : vector<128x128xf32>
    %36 = tpu.matmul %31, %35, %cst_12 {dimension_numbers = #tpu.dot_dimension_numbers<[1], [0], [0], [1], [0, 0, 1, 1], [], []>} : vector<128x128xbf16>, vector<128x128xbf16>, vector<128x128xf32> -> vector<128x128xf32>
    %c0_13 = arith.constant 0 : index
    %c0_14 = arith.constant 0 : index
    %37 = vector.load %arg3[%c0_13, %c0_14] : memref<128x128xbf16, #tpu.memory_space<vmem>>, vector<128x128xbf16>
    %cst_15 = arith.constant dense<0.000000e+00> : vector<128x128xf32>
    %38 = tpu.matmul %34, %37, %cst_15 {dimension_numbers = #tpu.dot_dimension_numbers<[1], [0], [0], [1], [0, 0, 1, 1], [], []>} : vector<128x128xbf16>, vector<128x128xbf16>, vector<128x128xf32> -> vector<128x128xf32>
    %39 = arith.addf %36, %38 : vector<128x128xf32>
    %c0_16 = arith.constant 0 : index
    %c0_17 = arith.constant 0 : index
    %40 = vector.load %arg4[%c0_16, %c0_17] : memref<1x128xf32, #tpu.memory_space<vmem>>, vector<1x128xf32>
    %41 = vector.broadcast %40 : vector<1x128xf32> to vector<128x128xf32>
    %42 = arith.addf %39, %41 : vector<128x128xf32>
    %43 = vector.shape_cast %42 : vector<128x128xf32> to vector<16x8x128xf32>
    %44 = arith.truncf %43 : vector<16x8x128xf32> to vector<16x8x128xbf16>
    %c0_18 = arith.constant 0 : index
    %c0_19 = arith.constant 0 : index
    %c0_20 = arith.constant 0 : index
    %45 = vector.load %arg5[%c0_18, %c0_19, %c0_20] : memref<16x8x128xbf16, #tpu.memory_space<vmem>>, vector<16x8x128xbf16>
    tpu.vector_store %arg5[%c0_18, %c0_19, %c0_20], %44 {strides = array<i32>} : memref<16x8x128xbf16, #tpu.memory_space<vmem>>, vector<16x8x128xbf16>,
    return
  }
  func.func @transform_0(%arg0: i32) -> (i32, i32, i32) {
    %c0_i32 = arith.constant 0 : i32
    %c0_i32_0 = arith.constant 0 : i32
    %c0_i32_1 = arith.constant 0 : i32
    return %arg0, %c0_i32, %c0_i32_0 : i32, i32, i32
  }
  func.func @transform_1(%arg0: i32) -> (i32, i32) {
    %c0_i32 = arith.constant 0 : i32
    %c0_i32_0 = arith.constant 0 : i32
    %c0_i32_1 = arith.constant 0 : i32
    return %c0_i32, %c0_i32_0 : i32, i32
  }
  func.func @transform_2(%arg0: i32) -> (i32, i32) {
    %c0_i32 = arith.constant 0 : i32
    %c0_i32_0 = arith.constant 0 : i32
    %c0_i32_1 = arith.constant 0 : i32
    return %c0_i32, %c0_i32_0 : i32, i32
  }
  func.func @transform_3(%arg0: i32) -> (i32, i32) {
    %c0_i32 = arith.constant 0 : i32
    %c0_i32_0 = arith.constant 0 : i32
    %c0_i32_1 = arith.constant 0 : i32
    return %c0_i32, %c0_i32_0 : i32, i32
  }
  func.func @transform_4(%arg0: i32) -> (i32, i32, i32) {
    %c0_i32 = arith.constant 0 : i32
    %c0_i32_0 = arith.constant 0 : i32
    %c0_i32_1 = arith.constant 0 : i32
    return %arg0, %c0_i32, %c0_i32_0 : i32, i32, i32
  }
}

</mosaic_0001>

<llo_original>
// kernel: patch_merging.1
$region0: #{patch_merging.1}
  #allocation0 [shape = 'u32[]', space=smem, size = 0x4, offset = 0x4, fixed_abs, tag = 'smem constant byte address 0x4 - core index']
  #allocation1 [shape = 'u32[144,128]{1,0:T(1,128)}', space=vmem, size = 0x12000, scoped, tag = 'internal scratch']
  %s0 = inlined_call_operand.vmem [shape: bf16[16,16,128], index: 0, kind: input, shape index: {}]
  %s1 = inlined_call_operand.vmem [shape: bf16[128,128], index: 1, kind: input, shape index: {}]
  %s2 = inlined_call_operand.vmem [shape: bf16[128,128], index: 2, kind: input, shape index: {}]
  %s3 = inlined_call_operand.vmem [shape: f32[1,128], index: 3, kind: input, shape index: {}]
  %s4 = inlined_call_operand.hbm [shape: bf16[16,8,128], index: 4, kind: output, shape index: {}]
  %s5 = sld [smem:[#allocation0]]
  $region26: #{patch_merging.1} parent=0
    _
  %s7 = ssub.s32 1, %s5
  %s8 = scalar_select 0, %s7, %s5
  $region1: #{patch_merging.1} parent=0
    #allocation2 [shape = 'u8[32768]{0}', space=vmem, size = 0x8000, scoped, tag = 'output window, operand 0, single buffered']
    #allocation3 [shape = 's32[1]{0}', space=sflag, size = 0x4, scoped, tag = 'scoped memory for patch_merging.1']
    %9 = vsyncpa [#allocation3], 0
    // Predicated region
    $region2: #{patch_merging.1} parent=1 // pred_check
      _
    $region3: #{patch_merging.1} parent=1 // pred_check_branch
      %11 = sbr.rel (0) target = $region5
    $region4: #{patch_merging.1} parent=1 // pred_region
      _
    $region5: #{patch_merging.1} parent=1 // pred_fallthru
      _
    // Predicated region
    $region6: #{patch_merging.1} parent=1 // pred_check
      _
    $region7: #{patch_merging.1} parent=1 // pred_check_branch
      %13 = sbr.rel (0) target = $region9
    $region8: #{patch_merging.1} parent=1 // pred_region
      _
    $region9: #{patch_merging.1} parent=1 // pred_fallthru
      _
    // Predicated region
    $region10: #{patch_merging.1} parent=1 // pred_check
      _
    $region11: #{patch_merging.1} parent=1 // pred_check_branch
      %15 = sbr.rel (0) target = $region13
    $region12: #{patch_merging.1} parent=1 // pred_region
      _
    $region13: #{patch_merging.1} parent=1 // pred_fallthru
      _
    // Predicated region
    $region14: #{patch_merging.1} parent=1 // pred_check
      _
    $region15: #{patch_merging.1} parent=1 // pred_check_branch
      %17 = sbr.rel (0) target = $region17
    $region16: #{patch_merging.1} parent=1 // pred_region
      _
    $region17: #{patch_merging.1} parent=1 // pred_fallthru
      _
    %v19 = vld [vmem:[%s0] sm:$0xf]
    %v20 = vld [vmem:[%s0 + $0x8] sm:$0xf]
    %v21 = vld [vmem:[%s0 + $0x10] sm:$0xf]
    %v22 = vld [vmem:[%s0 + $0x18] sm:$0xf]
    %v23 = vld [vmem:[%s0 + $0x20] sm:$0xf]
    %v24 = vld [vmem:[%s0 + $0x28] sm:$0xf]
    %v25 = vld [vmem:[%s0 + $0x30] sm:$0xf]
    %v26 = vld [vmem:[%s0 + $0x38] sm:$0xf]
    %v27 = vld [vmem:[%s0 + $0x40] sm:$0xf]
    %v28 = vld [vmem:[%s0 + $0x48] sm:$0xf]
    %v29 = vld [vmem:[%s0 + $0x50] sm:$0xf]
    %v30 = vld [vmem:[%s0 + $0x58] sm:$0xf]
    %v31 = vld [vmem:[%s0 + $0x60] sm:$0xf]
    %v32 = vld [vmem:[%s0 + $0x68] sm:$0xf]
    %v33 = vld [vmem:[%s0 + $0x70] sm:$0xf]
    %v34 = vld [vmem:[%s0 + $0x78] sm:$0xf]
    %v35 = vunpack.c.l.bf16 %v19
    %v36 = vunpack.c.l.bf16 %v20
    %v37 = vunpack.c.l.bf16 %v21
    %v38 = vunpack.c.l.bf16 %v22
    %v39 = vunpack.c.l.bf16 %v23
    %v40 = vunpack.c.l.bf16 %v24
    %v41 = vunpack.c.l.bf16 %v25
    %v42 = vunpack.c.l.bf16 %v26
    %v43 = vunpack.c.l.bf16 %v27
    %v44 = vunpack.c.l.bf16 %v28
    %v45 = vunpack.c.l.bf16 %v29
    %v46 = vunpack.c.l.bf16 %v30
    %v47 = vunpack.c.l.bf16 %v31
    %v48 = vunpack.c.l.bf16 %v32
    %v49 = vunpack.c.l.bf16 %v33
    %v50 = vunpack.c.l.bf16 %v34
    %v51 = vld [vmem:[%s0 + $0x4] sm:$0xf]
    %v52 = vld [vmem:[%s0 + $0xc] sm:$0xf]
    %v53 = vld [vmem:[%s0 + $0x14] sm:$0xf]
    %v54 = vld [vmem:[%s0 + $0x1c] sm:$0xf]
    %v55 = vld [vmem:[%s0 + $0x24] sm:$0xf]
    %v56 = vld [vmem:[%s0 + $0x2c] sm:$0xf]
    %v57 = vld [vmem:[%s0 + $0x34] sm:$0xf]
    %v58 = vld [vmem:[%s0 + $0x3c] sm:$0xf]
    %v59 = vld [vmem:[%s0 + $0x44] sm:$0xf]
    %v60 = vld [vmem:[%s0 + $0x4c] sm:$0xf]
    %v61 = vld [vmem:[%s0 + $0x54] sm:$0xf]
    %v62 = vld [vmem:[%s0 + $0x5c] sm:$0xf]
    %v63 = vld [vmem:[%s0 + $0x64] sm:$0xf]
    %v64 = vld [vmem:[%s0 + $0x6c] sm:$0xf]
    %v65 = vld [vmem:[%s0 + $0x74] sm:$0xf]
    %v66 = vld [vmem:[%s0 + $0x7c] sm:$0xf]
    %v67 = vunpack.c.l.bf16 %v51
    %v68 = vunpack.c.l.bf16 %v52
    %v69 = vunpack.c.l.bf16 %v53
    %v70 = vunpack.c.l.bf16 %v54
    %v71 = vunpack.c.l.bf16 %v55
    %v72 = vunpack.c.l.bf16 %v56
    %v73 = vunpack.c.l.bf16 %v57
    %v74 = vunpack.c.l.bf16 %v58
    %v75 = vunpack.c.l.bf16 %v59
    %v76 = vunpack.c.l.bf16 %v60
    %v77 = vunpack.c.l.bf16 %v61
    %v78 = vunpack.c.l.bf16 %v62
    %v79 = vunpack.c.l.bf16 %v63
    %v80 = vunpack.c.l.bf16 %v64
    %v81 = vunpack.c.l.bf16 %v65
    %v82 = vunpack.c.l.bf16 %v66
    %83 = vadd.xlane.f32.xlu0 %v35
    %v84 = vpop.xlane.xlu0 %83
    %85 = vadd.xlane.f32.xlu0 %v36
    %v86 = vpop.xlane.xlu0 %85
    %87 = vadd.xlane.f32.xlu0 %v37
    %v88 = vpop.xlane.xlu0 %87
    %89 = vadd.xlane.f32.xlu0 %v38
    %v90 = vpop.xlane.xlu0 %89
    %91 = vadd.xlane.f32.xlu0 %v39
    %v92 = vpop.xlane.xlu0 %91
    %93 = vadd.xlane.f32.xlu0 %v40
    %v94 = vpop.xlane.xlu0 %93
    %95 = vadd.xlane.f32.xlu0 %v41
    %v96 = vpop.xlane.xlu0 %95
    %97 = vadd.xlane.f32.xlu0 %v42
    %v98 = vpop.xlane.xlu0 %97
    %99 = vadd.xlane.f32.xlu0 %v43
    %v100 = vpop.xlane.xlu0 %99
    %101 = vadd.xlane.f32.xlu0 %v44
    %v102 = vpop.xlane.xlu0 %101
    %103 = vadd.xlane.f32.xlu0 %v45
    %v104 = vpop.xlane.xlu0 %103
    %105 = vadd.xlane.f32.xlu0 %v46
    %v106 = vpop.xlane.xlu0 %105
    %107 = vadd.xlane.f32.xlu0 %v47
    %v108 = vpop.xlane.xlu0 %107
    %109 = vadd.xlane.f32.xlu0 %v48
    %v110 = vpop.xlane.xlu0 %109
    %111 = vadd.xlane.f32.xlu0 %v49
    %v112 = vpop.xlane.xlu0 %111
    %113 = vadd.xlane.f32.xlu0 %v50
    %v114 = vpop.xlane.xlu0 %113
    %115 = vadd.xlane.f32.xlu0 %v67
    %v116 = vpop.xlane.xlu0 %115
    %117 = vadd.xlane.f32.xlu0 %v68
    %v118 = vpop.xlane.xlu0 %117
    %119 = vadd.xlane.f32.xlu0 %v69
    %v120 = vpop.xlane.xlu0 %119
    %121 = vadd.xlane.f32.xlu0 %v70
    %v122 = vpop.xlane.xlu0 %121
    %123 = vadd.xlane.f32.xlu0 %v71
    %v124 = vpop.xlane.xlu0 %123
    %125 = vadd.xlane.f32.xlu0 %v72
    %v126 = vpop.xlane.xlu0 %125
    %127 = vadd.xlane.f32.xlu0 %v73
    %v128 = vpop.xlane.xlu0 %127
    %129 = vadd.xlane.f32.xlu0 %v74
    %v130 = vpop.xlane.xlu0 %129
    %131 = vadd.xlane.f32.xlu0 %v75
    %v132 = vpop.xlane.xlu0 %131
    %133 = vadd.xlane.f32.xlu0 %v76
    %v134 = vpop.xlane.xlu0 %133
    %135 = vadd.xlane.f32.xlu0 %v77
    %v136 = vpop.xlane.xlu0 %135
    %137 = vadd.xlane.f32.xlu0 %v78
    %v138 = vpop.xlane.xlu0 %137
    %139 = vadd.xlane.f32.xlu0 %v79
    %v140 = vpop.xlane.xlu0 %139
    %141 = vadd.xlane.f32.xlu0 %v80
    %v142 = vpop.xlane.xlu0 %141
    %143 = vadd.xlane.f32.xlu0 %v81
    %v144 = vpop.xlane.xlu0 %143
    %145 = vadd.xlane.f32.xlu0 %v82
    %v146 = vpop.xlane.xlu0 %145
    %v147 = vadd.f32 %v84, %v116
    %v148 = vadd.f32 %v86, %v118
    %v149 = vadd.f32 %v88, %v120
    %v150 = vadd.f32 %v90, %v122
    %v151 = vadd.f32 %v92, %v124
    %v152 = vadd.f32 %v94, %v126
    %v153 = vadd.f32 %v96, %v128
    %v154 = vadd.f32 %v98, %v130
    %v155 = vadd.f32 %v100, %v132
    %v156 = vadd.f32 %v102, %v134
    %v157 = vadd.f32 %v104, %v136
    %v158 = vadd.f32 %v106, %v138
    %v159 = vadd.f32 %v108, %v140
    %v160 = vadd.f32 %v110, %v142
    %v161 = vadd.f32 %v112, %v144
    %v162 = vadd.f32 %v114, %v146
    %v163 = vmul.f32 %v147, 0.00390625
    %v164 = vmul.f32 %v148, 0.00390625
    %v165 = vmul.f32 %v149, 0.00390625
    %v166 = vmul.f32 %v150, 0.00390625
    %v167 = vmul.f32 %v151, 0.00390625
    %v168 = vmul.f32 %v152, 0.00390625
    %v169 = vmul.f32 %v153, 0.00390625
    %v170 = vmul.f32 %v154, 0.00390625
    %v171 = vmul.f32 %v155, 0.00390625
    %v172 = vmul.f32 %v156, 0.00390625
    %v173 = vmul.f32 %v157, 0.00390625
    %v174 = vmul.f32 %v158, 0.00390625
    %v175 = vmul.f32 %v159, 0.00390625
    %v176 = vmul.f32 %v160, 0.00390625
    %v177 = vmul.f32 %v161, 0.00390625
    %v178 = vmul.f32 %v162, 0.00390625
    %v179 = vsub.f32 %v35, %v163
    %v180 = vsub.f32 %v36, %v164
    %v181 = vsub.f32 %v37, %v165
    %v182 = vsub.f32 %v38, %v166
    %v183 = vsub.f32 %v39, %v167
    %v184 = vsub.f32 %v40, %v168
    %v185 = vsub.f32 %v41, %v169
    %v186 = vsub.f32 %v42, %v170
    %v187 = vsub.f32 %v43, %v171
    %v188 = vsub.f32 %v44, %v172
    %v189 = vsub.f32 %v45, %v173
    %v190 = vsub.f32 %v46, %v174
    %v191 = vsub.f32 %v47, %v175
    %v192 = vsub.f32 %v48, %v176
    %v193 = vsub.f32 %v49, %v177
    %v194 = vsub.f32 %v50, %v178
    %v195 = vsub.f32 %v67, %v163
    %v196 = vsub.f32 %v68, %v164
    %v197 = vsub.f32 %v69, %v165
    %v198 = vsub.f32 %v70, %v166
    %v199 = vsub.f32 %v71, %v167
    %v200 = vsub.f32 %v72, %v168
    %v201 = vsub.f32 %v73, %v169
    %v202 = vsub.f32 %v74, %v170
    %v203 = vsub.f32 %v75, %v171
    %v204 = vsub.f32 %v76, %v172
    %v205 = vsub.f32 %v77, %v173
    %v206 = vsub.f32 %v78, %v174
    %v207 = vsub.f32 %v79, %v175
    %v208 = vsub.f32 %v80, %v176
    %v209 = vsub.f32 %v81, %v177
    %v210 = vsub.f32 %v82, %v178
    %v211 = vmul.f32 %v179, %v179
    %v212 = vmul.f32 %v180, %v180
    %v213 = vmul.f32 %v181, %v181
    %v214 = vmul.f32 %v182, %v182
    %v215 = vmul.f32 %v183, %v183
    %v216 = vmul.f32 %v184, %v184
    %v217 = vmul.f32 %v185, %v185
    %v218 = vmul.f32 %v186, %v186
    %v219 = vmul.f32 %v187, %v187
    %v220 = vmul.f32 %v188, %v188
    %v221 = vmul.f32 %v189, %v189
    %v222 = vmul.f32 %v190, %v190
    %v223 = vmul.f32 %v191, %v191
    %v224 = vmul.f32 %v192, %v192
    %v225 = vmul.f32 %v193, %v193
    %v226 = vmul.f32 %v194, %v194
    %227 = vadd.xlane.f32.xlu0 %v211
    %v228 = vpop.xlane.xlu0 %227
    %229 = vadd.xlane.f32.xlu0 %v212
    %v230 = vpop.xlane.xlu0 %229
    %231 = vadd.xlane.f32.xlu0 %v213
    %v232 = vpop.xlane.xlu0 %231
    %233 = vadd.xlane.f32.xlu0 %v214
    %v234 = vpop.xlane.xlu0 %233
    %235 = vadd.xlane.f32.xlu0 %v215
    %v236 = vpop.xlane.xlu0 %235
    %237 = vadd.xlane.f32.xlu0 %v216
    %v238 = vpop.xlane.xlu0 %237
    %239 = vadd.xlane.f32.xlu0 %v217
    %v240 = vpop.xlane.xlu0 %239
    %241 = vadd.xlane.f32.xlu0 %v218
    %v242 = vpop.xlane.xlu0 %241
    %243 = vadd.xlane.f32.xlu0 %v219
    %v244 = vpop.xlane.xlu0 %243
    %245 = vadd.xlane.f32.xlu0 %v220
    %v246 = vpop.xlane.xlu0 %245
    %247 = vadd.xlane.f32.xlu0 %v221
    %v248 = vpop.xlane.xlu0 %247
    %249 = vadd.xlane.f32.xlu0 %v222
    %v250 = vpop.xlane.xlu0 %249
    %251 = vadd.xlane.f32.xlu0 %v223
    %v252 = vpop.xlane.xlu0 %251
    %253 = vadd.xlane.f32.xlu0 %v224
    %v254 = vpop.xlane.xlu0 %253
    %255 = vadd.xlane.f32.xlu0 %v225
    %v256 = vpop.xlane.xlu0 %255
    %257 = vadd.xlane.f32.xlu0 %v226
    %v258 = vpop.xlane.xlu0 %257
    %v259 = vmul.f32 %v195, %v195
    %v260 = vmul.f32 %v196, %v196
    %v261 = vmul.f32 %v197, %v197
    %v262 = vmul.f32 %v198, %v198
    %v263 = vmul.f32 %v199, %v199
    %v264 = vmul.f32 %v200, %v200
    %v265 = vmul.f32 %v201, %v201
    %v266 = vmul.f32 %v202, %v202
    %v267 = vmul.f32 %v203, %v203
    %v268 = vmul.f32 %v204, %v204
    %v269 = vmul.f32 %v205, %v205
    %v270 = vmul.f32 %v206, %v206
    %v271 = vmul.f32 %v207, %v207
    %v272 = vmul.f32 %v208, %v208
    %v273 = vmul.f32 %v209, %v209
    %v274 = vmul.f32 %v210, %v210
    %275 = vadd.xlane.f32.xlu0 %v259
    %v276 = vpop.xlane.xlu0 %275
    %277 = vadd.xlane.f32.xlu0 %v260
    %v278 = vpop.xlane.xlu0 %277
    %279 = vadd.xlane.f32.xlu0 %v261
    %v280 = vpop.xlane.xlu0 %279
    %281 = vadd.xlane.f32.xlu0 %v262
    %v282 = vpop.xlane.xlu0 %281
    %283 = vadd.xlane.f32.xlu0 %v263
    %v284 = vpop.xlane.xlu0 %283
    %285 = vadd.xlane.f32.xlu0 %v264
    %v286 = vpop.xlane.xlu0 %285
    %287 = vadd.xlane.f32.xlu0 %v265
    %v288 = vpop.xlane.xlu0 %287
    %289 = vadd.xlane.f32.xlu0 %v266
    %v290 = vpop.xlane.xlu0 %289
    %291 = vadd.xlane.f32.xlu0 %v267
    %v292 = vpop.xlane.xlu0 %291
    %293 = vadd.xlane.f32.xlu0 %v268
    %v294 = vpop.xlane.xlu0 %293
    %295 = vadd.xlane.f32.xlu0 %v269
    %v296 = vpop.xlane.xlu0 %295
    %297 = vadd.xlane.f32.xlu0 %v270
    %v298 = vpop.xlane.xlu0 %297
    %299 = vadd.xlane.f32.xlu0 %v271
    %v300 = vpop.xlane.xlu0 %299
    %301 = vadd.xlane.f32.xlu0 %v272
    %v302 = vpop.xlane.xlu0 %301
    %303 = vadd.xlane.f32.xlu0 %v273
    %v304 = vpop.xlane.xlu0 %303
    %305 = vadd.xlane.f32.xlu0 %v274
    %v306 = vpop.xlane.xlu0 %305
    %v307 = vadd.f32 %v228, %v276
    %v308 = vadd.f32 %v230, %v278
    %v309 = vadd.f32 %v232, %v280
    %v310 = vadd.f32 %v234, %v282
    %v311 = vadd.f32 %v236, %v284
    %v312 = vadd.f32 %v238, %v286
    %v313 = vadd.f32 %v240, %v288
    %v314 = vadd.f32 %v242, %v290
    %v315 = vadd.f32 %v244, %v292
    %v316 = vadd.f32 %v246, %v294
    %v317 = vadd.f32 %v248, %v296
    %v318 = vadd.f32 %v250, %v298
    %v319 = vadd.f32 %v252, %v300
    %v320 = vadd.f32 %v254, %v302
    %v321 = vadd.f32 %v256, %v304
    %v322 = vadd.f32 %v258, %v306
    %v323 = vmul.f32 %v307, 0.00390625
    %v324 = vmul.f32 %v308, 0.00390625
    %v325 = vmul.f32 %v309, 0.00390625
    %v326 = vmul.f32 %v310, 0.00390625
    %v327 = vmul.f32 %v311, 0.00390625
    %v328 = vmul.f32 %v312, 0.00390625
    %v329 = vmul.f32 %v313, 0.00390625
    %v330 = vmul.f32 %v314, 0.00390625
    %v331 = vmul.f32 %v315, 0.00390625
    %v332 = vmul.f32 %v316, 0.00390625
    %v333 = vmul.f32 %v317, 0.00390625
    %v334 = vmul.f32 %v318, 0.00390625
    %v335 = vmul.f32 %v319, 0.00390625
    %v336 = vmul.f32 %v320, 0.00390625
    %v337 = vmul.f32 %v321, 0.00390625
    %v338 = vmul.f32 %v322, 0.00390625
    %v339 = vadd.f32 %v323, 1e-05
    %v340 = vadd.f32 %v324, 1e-05
    %v341 = vadd.f32 %v325, 1e-05
    %v342 = vadd.f32 %v326, 1e-05
    %v343 = vadd.f32 %v327, 1e-05
    %v344 = vadd.f32 %v328, 1e-05
    %v345 = vadd.f32 %v329, 1e-05
    %v346 = vadd.f32 %v330, 1e-05
    %v347 = vadd.f32 %v331, 1e-05
    %v348 = vadd.f32 %v332, 1e-05
    %v349 = vadd.f32 %v333, 1e-05
    %v350 = vadd.f32 %v334, 1e-05
    %v351 = vadd.f32 %v335, 1e-05
    %v352 = vadd.f32 %v336, 1e-05
    %v353 = vadd.f32 %v337, 1e-05
    %v354 = vadd.f32 %v338, 1e-05
    %v355 = vrsqrt.pop %v339
    %v356 = vrsqrt.pop %v340
    %v357 = vrsqrt.pop %v341
    %v358 = vrsqrt.pop %v342
    %v359 = vrsqrt.pop %v343
    %v360 = vrsqrt.pop %v344
    %v361 = vrsqrt.pop %v345
    %v362 = vrsqrt.pop %v346
    %v363 = vrsqrt.pop %v347
    %v364 = vrsqrt.pop %v348
    %v365 = vrsqrt.pop %v349
    %v366 = vrsqrt.pop %v350
    %v367 = vrsqrt.pop %v351
    %v368 = vrsqrt.pop %v352
    %v369 = vrsqrt.pop %v353
    %v370 = vrsqrt.pop %v354
    %v371 = vmul.f32 %v179, %v355
    %v372 = vmul.f32 %v180, %v356
    %v373 = vmul.f32 %v181, %v357
    %v374 = vmul.f32 %v182, %v358
    %v375 = vmul.f32 %v183, %v359
    %v376 = vmul.f32 %v184, %v360
    %v377 = vmul.f32 %v185, %v361
    %v378 = vmul.f32 %v186, %v362
    %v379 = vmul.f32 %v187, %v363
    %v380 = vmul.f32 %v188, %v364
    %v381 = vmul.f32 %v189, %v365
    %v382 = vmul.f32 %v190, %v366
    %v383 = vmul.f32 %v191, %v367
    %v384 = vmul.f32 %v192, %v368
    %v385 = vmul.f32 %v193, %v369
    %v386 = vmul.f32 %v194, %v370
    %v387 = vpack.c.bf16 %v372, %v371
    %v388 = vpack.c.bf16 %v374, %v373
    %v389 = vpack.c.bf16 %v376, %v375
    %v390 = vpack.c.bf16 %v378, %v377
    %v391 = vpack.c.bf16 %v380, %v379
    %v392 = vpack.c.bf16 %v382, %v381
    %v393 = vpack.c.bf16 %v384, %v383
    %v394 = vpack.c.bf16 %v386, %v385
    %v395 = vmul.f32 %v195, %v355
    %v396 = vmul.f32 %v196, %v356
    %v397 = vmul.f32 %v197, %v357
    %v398 = vmul.f32 %v198, %v358
    %v399 = vmul.f32 %v199, %v359
    %v400 = vmul.f32 %v200, %v360
    %v401 = vmul.f32 %v201, %v361
    %v402 = vmul.f32 %v202, %v362
    %v403 = vmul.f32 %v203, %v363
    %v404 = vmul.f32 %v204, %v364
    %v405 = vmul.f32 %v205, %v365
    %v406 = vmul.f32 %v206, %v366
    %v407 = vmul.f32 %v207, %v367
    %v408 = vmul.f32 %v208, %v368
    %v409 = vmul.f32 %v209, %v369
    %v410 = vmul.f32 %v210, %v370
    %v411 = vpack.c.bf16 %v396, %v395
    %v412 = vpack.c.bf16 %v398, %v397
    %v413 = vpack.c.bf16 %v400, %v399
    %v414 = vpack.c.bf16 %v402, %v401
    %v415 = vpack.c.bf16 %v404, %v403
    %v416 = vpack.c.bf16 %v406, %v405
    %v417 = vpack.c.bf16 %v408, %v407
    %v418 = vpack.c.bf16 %v410, %v409
    %v419 = vld [vmem:[%s1] sm:$0xf]
    %v420 = vld [vmem:[%s1 + $0x4] sm:$0xf]
    %v421 = vld [vmem:[%s1 + $0x8] sm:$0xf]
    %v422 = vld [vmem:[%s1 + $0xc] sm:$0xf]
    %v423 = vld [vmem:[%s1 + $0x10] sm:$0xf]
    %v424 = vld [vmem:[%s1 + $0x14] sm:$0xf]
    %v425 = vld [vmem:[%s1 + $0x18] sm:$0xf]
    %v426 = vld [vmem:[%s1 + $0x1c] sm:$0xf]
    %v427 = vld [vmem:[%s1 + $0x20] sm:$0xf]
    %v428 = vld [vmem:[%s1 + $0x24] sm:$0xf]
    %v429 = vld [vmem:[%s1 + $0x28] sm:$0xf]
    %v430 = vld [vmem:[%s1 + $0x2c] sm:$0xf]
    %v431 = vld [vmem:[%s1 + $0x30] sm:$0xf]
    %v432 = vld [vmem:[%s1 + $0x34] sm:$0xf]
    %v433 = vld [vmem:[%s1 + $0x38] sm:$0xf]
    %v434 = vld [vmem:[%s1 + $0x3c] sm:$0xf]
    %v435 = vld [vmem:[%s2] sm:$0xf]
    %v436 = vld [vmem:[%s2 + $0x4] sm:$0xf]
    %v437 = vld [vmem:[%s2 + $0x8] sm:$0xf]
    %v438 = vld [vmem:[%s2 + $0xc] sm:$0xf]
    %v439 = vld [vmem:[%s2 + $0x10] sm:$0xf]
    %v440 = vld [vmem:[%s2 + $0x14] sm:$0xf]
    %v441 = vld [vmem:[%s2 + $0x18] sm:$0xf]
    %v442 = vld [vmem:[%s2 + $0x1c] sm:$0xf]
    %v443 = vld [vmem:[%s2 + $0x20] sm:$0xf]
    %v444 = vld [vmem:[%s2 + $0x24] sm:$0xf]
    %v445 = vld [vmem:[%s2 + $0x28] sm:$0xf]
    %v446 = vld [vmem:[%s2 + $0x2c] sm:$0xf]
    %v447 = vld [vmem:[%s2 + $0x30] sm:$0xf]
    %v448 = vld [vmem:[%s2 + $0x34] sm:$0xf]
    %v449 = vld [vmem:[%s2 + $0x38] sm:$0xf]
    %v450 = vld [vmem:[%s2 + $0x3c] sm:$0xf]
    %v467 = vunpack.c.l.b16 %v435
    %v468 = vunpack.c.l.b16 %v436
    %v469 = vunpack.c.l.b16 %v437
    %v470 = vunpack.c.l.b16 %v438
    %v471 = vunpack.c.l.b16 %v439
    %v472 = vunpack.c.l.b16 %v440
    %v473 = vunpack.c.l.b16 %v441
    %v474 = vunpack.c.l.b16 %v442
    %v475 = vunpack.c.l.b16 %v443
    %v476 = vunpack.c.l.b16 %v444
    %v477 = vunpack.c.l.b16 %v445
    %v478 = vunpack.c.l.b16 %v446
    %v479 = vunpack.c.l.b16 %v447
    %v480 = vunpack.c.l.b16 %v448
    %v481 = vunpack.c.l.b16 %v449
    %v482 = vunpack.c.l.b16 %v450
    %v483 = vpack.c.b16 %v468, %v467
    %v484 = vpack.c.b16 %v470, %v469
    %v485 = vpack.c.b16 %v472, %v471
    %v486 = vpack.c.b16 %v474, %v473
    %v487 = vpack.c.b16 %v476, %v475
    %v488 = vpack.c.b16 %v478, %v477
    %v489 = vpack.c.b16 %v480, %v479
    %v490 = vpack.c.b16 %v482, %v481
    %499 = vmatprep.subr.bf16.mxu0 0
    %500 = vmatpush1.bf16.msra.mxu0 %v490
    %501 = vmatprep.subr.bf16.mxu0 0
    %502 = vmatpush1.bf16.msra.mxu0 %v489
    %503 = vmatprep.subr.bf16.mxu0 0
    %504 = vmatpush1.bf16.msra.mxu0 %v488
    %505 = vmatprep.subr.bf16.mxu0 0
    %506 = vmatpush1.bf16.msra.mxu0 %v487
    %507 = vmatprep.subr.bf16.mxu0 0
    %508 = vmatpush1.bf16.msra.mxu0 %v486
    %509 = vmatprep.subr.bf16.mxu0 0
    %510 = vmatpush1.bf16.msra.mxu0 %v485
    %511 = vmatprep.subr.bf16.mxu0 0
    %512 = vmatpush1.bf16.msra.mxu0 %v484
    %513 = vmatprep.subr.bf16.mxu0 0
    %514 = vmatpush1.bf16.msra.mxu0 %v483
    %515 = vmatprep.subr.bf16.mxu0 0
    %516 = vmatpush2.bf16.msra.mxu0 0
    %517 = vmatprep.subr.bf16.mxu0 0
    %518 = vmatpush2.bf16.msra.mxu0 0
    %519 = vmatprep.subr.bf16.mxu0 0
    %520 = vmatpush2.bf16.msra.mxu0 0
    %521 = vmatprep.subr.bf16.mxu0 0
    %522 = vmatpush2.bf16.msra.mxu0 0
    %523 = vmatprep.subr.bf16.mxu0 0
    %524 = vmatpush2.bf16.msra.mxu0 0
    %525 = vmatprep.subr.bf16.mxu0 0
    %526 = vmatpush2.bf16.msra.mxu0 0
    %527 = vmatprep.subr.bf16.mxu0 0
    %528 = vmatpush2.bf16.msra.mxu0 0
    %529 = vmatprep.subr.bf16.mxu0 0
    %530 = vmatpush2.bf16.msra.mxu0 0
    %531 = vmatprep.mubr.bf16.mxu0 0
    %532 = vmatmul.mubr.bf16.gmra.mxu0 %v411
    %v533 = vpop.f32.mrf.mxu0
    %v534 = vadd.f32 0.0, %v533
    %v535 = vpop.f32.mrf.mxu0
    %v536 = vpop.f32.mrf.mxu0
    %v537 = vadd.f32 0.0, %v536
    %v538 = vpop.f32.mrf.mxu0
    %539 = vmatprep.mubr.bf16.mxu0 0
    %540 = vmatmul.mubr.bf16.gmra.mxu0 %v412
    %v541 = vpop.f32.mrf.mxu0
    %v542 = vadd.f32 0.0, %v541
    %v543 = vpop.f32.mrf.mxu0
    %v544 = vpop.f32.mrf.mxu0
    %v545 = vadd.f32 0.0, %v544
    %v546 = vpop.f32.mrf.mxu0
    %547 = vmatprep.mubr.bf16.mxu0 0
    %548 = vmatmul.mubr.bf16.gmra.mxu0 %v413
    %v549 = vpop.f32.mrf.mxu0
    %v550 = vadd.f32 0.0, %v549
    %v551 = vpop.f32.mrf.mxu0
    %v552 = vpop.f32.mrf.mxu0
    %v553 = vadd.f32 0.0, %v552
    %v554 = vpop.f32.mrf.mxu0
    %555 = vmatprep.mubr.bf16.mxu0 0
    %556 = vmatmul.mubr.bf16.gmra.mxu0 %v414
    %v557 = vpop.f32.mrf.mxu0
    %v558 = vadd.f32 0.0, %v557
    %v559 = vpop.f32.mrf.mxu0
    %v560 = vpop.f32.mrf.mxu0
    %v561 = vadd.f32 0.0, %v560
    %v562 = vpop.f32.mrf.mxu0
    %563 = vmatprep.mubr.bf16.mxu0 0
    %564 = vmatmul.mubr.bf16.gmra.mxu0 %v415
    %v565 = vpop.f32.mrf.mxu0
    %v566 = vadd.f32 0.0, %v565
    %v567 = vpop.f32.mrf.mxu0
    %v568 = vpop.f32.mrf.mxu0
    %v569 = vadd.f32 0.0, %v568
    %v570 = vpop.f32.mrf.mxu0
    %571 = vmatprep.mubr.bf16.mxu0 0
    %572 = vmatmul.mubr.bf16.gmra.mxu0 %v416
    %v573 = vpop.f32.mrf.mxu0
    %v574 = vadd.f32 0.0, %v573
    %v575 = vpop.f32.mrf.mxu0
    %v576 = vpop.f32.mrf.mxu0
    %v577 = vadd.f32 0.0, %v576
    %v578 = vpop.f32.mrf.mxu0
    %579 = vmatprep.mubr.bf16.mxu0 0
    %580 = vmatmul.mubr.bf16.gmra.mxu0 %v417
    %v581 = vpop.f32.mrf.mxu0
    %v582 = vadd.f32 0.0, %v581
    %v583 = vpop.f32.mrf.mxu0
    %v584 = vpop.f32.mrf.mxu0
    %v585 = vadd.f32 0.0, %v584
    %v586 = vpop.f32.mrf.mxu0
    %587 = vmatprep.mubr.bf16.mxu0 0
    %588 = vmatmul.mubr.bf16.gmra.mxu0 %v418
    %v589 = vpop.f32.mrf.mxu0
    %v590 = vadd.f32 0.0, %v589
    %v591 = vpop.f32.mrf.mxu0
    %v592 = vpop.f32.mrf.mxu0
    %v593 = vadd.f32 0.0, %v592
    %v594 = vpop.f32.mrf.mxu0
    %595 = vdwg.mxu0
    %v612 = vunpack.c.l.b16 %v419
    %v613 = vunpack.c.l.b16 %v420
    %v614 = vunpack.c.l.b16 %v421
    %v615 = vunpack.c.l.b16 %v422
    %v616 = vunpack.c.l.b16 %v423
    %v617 = vunpack.c.l.b16 %v424
    %v618 = vunpack.c.l.b16 %v425
    %v619 = vunpack.c.l.b16 %v426
    %v620 = vunpack.c.l.b16 %v427
    %v621 = vunpack.c.l.b16 %v428
    %v622 = vunpack.c.l.b16 %v429
    %v623 = vunpack.c.l.b16 %v430
    %v624 = vunpack.c.l.b16 %v431
    %v625 = vunpack.c.l.b16 %v432
    %v626 = vunpack.c.l.b16 %v433
    %v627 = vunpack.c.l.b16 %v434
    %v628 = vpack.c.b16 %v613, %v612
    %v629 = vpack.c.b16 %v615, %v614
    %v630 = vpack.c.b16 %v617, %v616
    %v631 = vpack.c.b16 %v619, %v618
    %v632 = vpack.c.b16 %v621, %v620
    %v633 = vpack.c.b16 %v623, %v622
    %v634 = vpack.c.b16 %v625, %v624
    %v635 = vpack.c.b16 %v627, %v626
    %644 = vmatprep.subr.bf16.mxu0 0
    %645 = vmatpush1.bf16.msra.mxu0 %v635
    %646 = vmatprep.subr.bf16.mxu0 0
    %647 = vmatpush1.bf16.msra.mxu0 %v634
    %648 = vmatprep.subr.bf16.mxu0 0
    %649 = vmatpush1.bf16.msra.mxu0 %v633
    %650 = vmatprep.subr.bf16.mxu0 0
    %651 = vmatpush1.bf16.msra.mxu0 %v632
    %652 = vmatprep.subr.bf16.mxu0 0
    %653 = vmatpush1.bf16.msra.mxu0 %v631
    %654 = vmatprep.subr.bf16.mxu0 0
    %655 = vmatpush1.bf16.msra.mxu0 %v630
    %656 = vmatprep.subr.bf16.mxu0 0
    %657 = vmatpush1.bf16.msra.mxu0 %v629
    %658 = vmatprep.subr.bf16.mxu0 0
    %659 = vmatpush1.bf16.msra.mxu0 %v628
    %660 = vmatprep.subr.bf16.mxu0 0
    %661 = vmatpush2.bf16.msra.mxu0 0
    %662 = vmatprep.subr.bf16.mxu0 0
    %663 = vmatpush2.bf16.msra.mxu0 0
    %664 = vmatprep.subr.bf16.mxu0 0
    %665 = vmatpush2.bf16.msra.mxu0 0
    %666 = vmatprep.subr.bf16.mxu0 0
    %667 = vmatpush2.bf16.msra.mxu0 0
    %668 = vmatprep.subr.bf16.mxu0 0
    %669 = vmatpush2.bf16.msra.mxu0 0
    %670 = vmatprep.subr.bf16.mxu0 0
    %671 = vmatpush2.bf16.msra.mxu0 0
    %672 = vmatprep.subr.bf16.mxu0 0
    %673 = vmatpush2.bf16.msra.mxu0 0
    %674 = vmatprep.subr.bf16.mxu0 0
    %675 = vmatpush2.bf16.msra.mxu0 0
    %676 = vmatprep.mubr.bf16.mxu0 0
    %677 = vmatmul.mubr.bf16.gmra.mxu0 %v387
    %v678 = vpop.f32.mrf.mxu0
    %v679 = vadd.f32 %v534, %v678
    %v680 = vpop.f32.mrf.mxu0
    %v681 = vpop.f32.mrf.mxu0
    %v682 = vadd.f32 %v537, %v681
    %v683 = vpop.f32.mrf.mxu0
    %684 = vmatprep.mubr.bf16.mxu0 0
    %685 = vmatmul.mubr.bf16.gmra.mxu0 %v388
    %v686 = vpop.f32.mrf.mxu0
    %v687 = vadd.f32 %v542, %v686
    %v688 = vpop.f32.mrf.mxu0
    %v689 = vpop.f32.mrf.mxu0
    %v690 = vadd.f32 %v545, %v689
    %v691 = vpop.f32.mrf.mxu0
    %692 = vmatprep.mubr.bf16.mxu0 0
    %693 = vmatmul.mubr.bf16.gmra.mxu0 %v389
    %v694 = vpop.f32.mrf.mxu0
    %v695 = vadd.f32 %v550, %v694
    %v696 = vpop.f32.mrf.mxu0
    %v697 = vpop.f32.mrf.mxu0
    %v698 = vadd.f32 %v553, %v697
    %v699 = vpop.f32.mrf.mxu0
    %700 = vmatprep.mubr.bf16.mxu0 0
    %701 = vmatmul.mubr.bf16.gmra.mxu0 %v390
    %v702 = vpop.f32.mrf.mxu0
    %v703 = vadd.f32 %v558, %v702
    %v704 = vpop.f32.mrf.mxu0
    %v705 = vpop.f32.mrf.mxu0
    %v706 = vadd.f32 %v561, %v705
    %v707 = vpop.f32.mrf.mxu0
    %708 = vmatprep.mubr.bf16.mxu0 0
    %709 = vmatmul.mubr.bf16.gmra.mxu0 %v391
    %v710 = vpop.f32.mrf.mxu0
    %v711 = vadd.f32 %v566, %v710
    %v712 = vpop.f32.mrf.mxu0
    %v713 = vpop.f32.mrf.mxu0
    %v714 = vadd.f32 %v569, %v713
    %v715 = vpop.f32.mrf.mxu0
    %716 = vmatprep.mubr.bf16.mxu0 0
    %717 = vmatmul.mubr.bf16.gmra.mxu0 %v392
    %v718 = vpop.f32.mrf.mxu0
    %v719 = vadd.f32 %v574, %v718
    %v720 = vpop.f32.mrf.mxu0
    %v721 = vpop.f32.mrf.mxu0
    %v722 = vadd.f32 %v577, %v721
    %v723 = vpop.f32.mrf.mxu0
    %724 = vmatprep.mubr.bf16.mxu0 0
    %725 = vmatmul.mubr.bf16.gmra.mxu0 %v393
    %v726 = vpop.f32.mrf.mxu0
    %v727 = vadd.f32 %v582, %v726
    %v728 = vpop.f32.mrf.mxu0
    %v729 = vpop.f32.mrf.mxu0
    %v730 = vadd.f32 %v585, %v729
    %v731 = vpop.f32.mrf.mxu0
    %732 = vmatprep.mubr.bf16.mxu0 0
    %733 = vmatmul.mubr.bf16.gmra.mxu0 %v394
    %v734 = vpop.f32.mrf.mxu0
    %v735 = vadd.f32 %v590, %v734
    %v736 = vpop.f32.mrf.mxu0
    %v737 = vpop.f32.mrf.mxu0
    %v738 = vadd.f32 %v593, %v737
    %v739 = vpop.f32.mrf.mxu0
    %740 = vdwg.mxu0
    %v741 = vld [vmem:[%s3] sm:$0x1]
    %v743 = vlaneseq
    %v744 = vshrl.u32 %v743, 7
    %v745 = vsub.s32 0, %v744
    %v746 = vrot.slane %v741, %v745
    %v748 = vadd.f32 %v679, %v746
    %v749 = vadd.f32 %v682, %v746
    %v750 = vadd.f32 %v687, %v746
    %v751 = vadd.f32 %v690, %v746
    %v752 = vadd.f32 %v695, %v746
    %v753 = vadd.f32 %v698, %v746
    %v754 = vadd.f32 %v703, %v746
    %v755 = vadd.f32 %v706, %v746
    %v756 = vadd.f32 %v711, %v746
    %v757 = vadd.f32 %v714, %v746
    %v758 = vadd.f32 %v719, %v746
    %v759 = vadd.f32 %v722, %v746
    %v760 = vadd.f32 %v727, %v746
    %v761 = vadd.f32 %v730, %v746
    %v762 = vadd.f32 %v735, %v746
    %v763 = vadd.f32 %v738, %v746
    %v764 = vpack.c.bf16 %v748, %v748
    %v765 = vpack.c.bf16 %v749, %v749
    %v766 = vpack.c.bf16 %v750, %v750
    %v767 = vpack.c.bf16 %v751, %v751
    %v768 = vpack.c.bf16 %v752, %v752
    %v769 = vpack.c.bf16 %v753, %v753
    %v770 = vpack.c.bf16 %v754, %v754
    %v771 = vpack.c.bf16 %v755, %v755
    %v772 = vpack.c.bf16 %v756, %v756
    %v773 = vpack.c.bf16 %v757, %v757
    %v774 = vpack.c.bf16 %v758, %v758
    %v775 = vpack.c.bf16 %v759, %v759
    %v776 = vpack.c.bf16 %v760, %v760
    %v777 = vpack.c.bf16 %v761, %v761
    %v778 = vpack.c.bf16 %v762, %v762
    %v779 = vpack.c.bf16 %v763, %v763
    %780 = vst [vmem:[#allocation2] sm:$0xf] %v764
    %781 = vst [vmem:[#allocation2 + $0x4] sm:$0xf] %v765
    %782 = vst [vmem:[#allocation2 + $0x8] sm:$0xf] %v766
    %783 = vst [vmem:[#allocation2 + $0xc] sm:$0xf] %v767
    %784 = vst [vmem:[#allocation2 + $0x10] sm:$0xf] %v768
    %785 = vst [vmem:[#allocation2 + $0x14] sm:$0xf] %v769
    %786 = vst [vmem:[#allocation2 + $0x18] sm:$0xf] %v770
    %787 = vst [vmem:[#allocation2 + $0x1c] sm:$0xf] %v771
    %788 = vst [vmem:[#allocation2 + $0x20] sm:$0xf] %v772
    %789 = vst [vmem:[#allocation2 + $0x24] sm:$0xf] %v773
    %790 = vst [vmem:[#allocation2 + $0x28] sm:$0xf] %v774
    %791 = vst [vmem:[#allocation2 + $0x2c] sm:$0xf] %v775
    %792 = vst [vmem:[#allocation2 + $0x30] sm:$0xf] %v776
    %793 = vst [vmem:[#allocation2 + $0x34] sm:$0xf] %v777
    %794 = vst [vmem:[#allocation2 + $0x38] sm:$0xf] %v778
    %795 = vst [vmem:[#allocation2 + $0x3c] sm:$0xf] %v779
    // Predicated region
    $region18: #{patch_merging.1} parent=1 // pred_check
      _
    $region19: #{patch_merging.1} parent=1 // pred_check_branch
      %797 = sbr.rel (0) target = $region21
    $region20: #{patch_merging.1} parent=1 // pred_region
      %s799 = ssub.s32 1024, 1024
      %800 = vsyncadd [#allocation3], %s799
      %s801 = sshll.u32 [#allocation2], 4
      %s802 = int_to_ptr.vmem [resolvable:$true] %s801
      %807 = dma.vmem_to_hbm [thread:$0]  %s802, 1024, %s4, [#allocation3], 64, 64, 4
    $region21: #{patch_merging.1} parent=1 // pred_fallthru
      _
    // Predicated region
    $region22: #{patch_merging.1} parent=1 // pred_check
      _
    $region23: #{patch_merging.1} parent=1 // pred_check_branch
      %809 = sbr.rel (0) target = $region25
    $region24: #{patch_merging.1} parent=1 // pred_region
      %810 = dma.done [#allocation3], 1024
    $region25: #{patch_merging.1} parent=1 // pred_fallthru
      _
    %811 = vsyncpa [#allocation3], 1

</llo_original>
